<compile_context>
chip_gen: v7x
topology: tpu7x:2x2x1
jax: 0.10.0
libtpu: 0.0.40
codegen_flags: <defaults>
</compile_context>

<pallas_src>
import math

import jax
import jax.numpy as jnp
import numpy as np
from jax.experimental import pallas as pl
from jax.experimental.pallas import tpu as pltpu

NEG_SLOPE = 0.01           # torch.nn.LeakyReLU default negative_slope
_MAX_PACKED_WIDTH = 2048   # cap on packed row width (keeps kron weights small)


def _leaky_relu(x):
    return jnp.where(x >= 0, x, NEG_SLOPE * x)


def _round_up(a, m):
    return ((a + m - 1) // m) * m


def _vmem_capacity_bytes():
    """Per-TensorCore VMEM capacity; conservative (v7x) fallback if unknown."""
    try:
        cap = int(getattr(pltpu.get_tpu_info(), "vmem_capacity_bytes"))
        if cap > 0:
            return cap
    except Exception:
        pass
    return 64 * 1024 * 1024


def _choose_packing(input_dim):
    """Pick (padded feature dim, samples-per-row) so pack*d_pad is a multiple of
    128 (lane dense) and not absurdly wide."""
    for align in (1, 2, 4, 8, 16, 32, 64, 128):
        d = _round_up(input_dim, align)
        pack = 128 // math.gcd(d, 128)
        if pack * d <= _MAX_PACKED_WIDTH:
            return d, pack
    return _round_up(input_dim, 128), 1   # huge feature dim: still lane dense


def _pack_weight(w, pack):
    """(in, out) -> block_diag of `pack` copies: (pack*in, pack*out). Exact."""
    if pack == 1:
        return w
    return jnp.kron(jnp.eye(pack, dtype=w.dtype), w)


def _pack_bias(b, pack):
    """(1, out) -> (1, pack*out)."""
    if pack == 1:
        return b
    return jnp.tile(b, (1, pack))


def _make_kernel(compute_dtype):
    def kernel(x_ref,
               w1_ref, b1_ref, w2_ref, b2_ref,
               w3_ref, b3_ref, w4_ref, b4_ref,
               out_ref):
        """Fused 4-layer MLP autoencoder forward on one lane-dense batch tile."""
        h = x_ref[...]                                   # native input dtype

        def layer(h, w_ref, b_ref):
            # bf16 operands go straight to the MXU when compute_dtype is bf16;
            # accumulation and activation stay in f32.
            y = jnp.dot(h.astype(compute_dtype), w_ref[...],
                        preferred_element_type=jnp.float32)
            return _leaky_relu(y + b_ref[...])

        h = layer(h, w1_ref, b1_ref)    # encoder
        h = layer(h, w2_ref, b2_ref)
        h = layer(h, w3_ref, b3_ref)    # decoder
        h = layer(h, w4_ref, b4_ref)

        out_ref[...] = h.astype(out_ref.dtype)           # cast only on store
    return kernel


def autoencoder_forward(x, params, *, block_batch=16384, out_dtype=None):
    """Pallas autoencoder forward.

    x: (B, input_dim) array (any B, any float dtype; bf16 input -> bf16 MXU).
    params: weights stored as (in, out), biases as (1, out).
    block_batch: target samples per grid step (upper bound; the wrapper clamps
                 it so the tile fits VMEM and the grid keeps >= 2-4 steps).
    out_dtype: HBM dtype of the result (defaults to x.dtype).
    """
    B, input_dim = x.shape
    out_dtype = np.dtype(out_dtype) if out_dtype is not None else np.dtype(x.dtype)
    in_item = np.dtype(x.dtype).itemsize
    out_item = out_dtype.itemsize

    # MXU operand dtype follows the producer: bf16 in -> bf16 matmuls (frees the
    # VPU cast on v5e and an f32 VMEM copy everywhere); otherwise f32.
    compute_dtype = jnp.bfloat16 if x.dtype == jnp.bfloat16 else jnp.float32

    w = [params[f"w{i}"] for i in range(1, 5)]
    b = [params[f"b{i}"] for i in range(1, 5)]
    hid_dim = w[0].shape[1]
    enc_dim = w[1].shape[1]

    # ---- lane-dense packing: `pack` samples per row of width pack*d_pad ----
    d_pad, pack = _choose_packing(input_dim)
    width = pack * d_pad

    if d_pad != input_dim:   # zero rows/cols keep the math exact
        w = [jnp.pad(w[0], ((0, d_pad - input_dim), (0, 0))), w[1], w[2],
             jnp.pad(w[3], ((0, 0), (0, d_pad - input_dim)))]
        b = [b[0], b[1], b[2], jnp.pad(b[3], ((0, 0), (0, d_pad - input_dim)))]

    pw = [_pack_weight(wi.astype(compute_dtype), pack) for wi in w]
    pb = [_pack_bias(bi.astype(jnp.float32), pack) for bi in b]

    # ---- minimal batch padding: only up to a whole packed row ----
    b_pad = _round_up(B, pack)
    rows = b_pad // pack
    if b_pad != B or d_pad != input_dim:
        x = jnp.pad(x, ((0, b_pad - B), (0, d_pad - input_dim)))
    x_packed = x.reshape(rows, width)            # contiguous reshape, no cast

    # ---- tile sizing with honest VMEM accounting ----
    sublane = 16 if (x.dtype == jnp.bfloat16 or out_dtype == jnp.bfloat16) else 8

    layer_widths = (pack * hid_dim, pack * enc_dim, pack * hid_dim, width)
    # double-buffered in/out tiles + ~2 f32 temporaries per fused layer
    per_row_bytes = (2 * width * in_item + 2 * width * out_item
                     + 4 * 2 * sum(layer_widths))
    weight_bytes = sum(int(a.size) * a.dtype.itemsize for a in pw + pb)

    vmem_cap = _vmem_capacity_bytes()
    if vmem_cap <= 80 * 1024 * 1024:             # v7x: 64 MiB per TensorCore
        tile_budget, vmem_ceiling = 12 << 20, 40 << 20
    else:                                        # v5e / v6e: 128 MiB
        tile_budget, vmem_ceiling = 24 << 20, 48 << 20

    act_budget = max(2 * sublane * per_row_bytes, tile_budget - 2 * weight_bytes)
    max_rb = max(sublane, (act_budget // per_row_bytes) // sublane * sublane)

    rb = _round_up(pl.cdiv(max(1, min(block_batch, B)), pack), sublane)
    rb = min(rb, _round_up(rows, sublane))
    # keep the grid at >= 2 (ideally >= 4) steps: enables DMA/compute overlap and
    # lets the "parallel" axis shard across both v7x TensorCores.
    if rows >= 4 * sublane:
        rb = min(rb, _round_up(pl.cdiv(rows, 4), sublane))
    elif rows > sublane:
        rb = min(rb, _round_up(pl.cdiv(rows, 2), sublane))
    rb = int(max(sublane, min(rb, max_rb)))

    grid = (pl.cdiv(rows, rb),)                  # ragged final block is masked

    vmem_need = rb * per_row_bytes + 2 * weight_bytes + (2 << 20)
    vmem_limit = int(min(max(vmem_need, 16 << 20), vmem_ceiling))

    def resident(arr):
        # whole-array block, constant index_map -> fetched once, VMEM-resident
        return pl.BlockSpec(arr.shape, lambda i: (0, 0))

    out_packed = pl.pallas_call(
        _make_kernel(compute_dtype),
        out_shape=jax.ShapeDtypeStruct((rows, width), out_dtype),
        grid_spec=pltpu.PrefetchScalarGridSpec(
            num_scalar_prefetch=0,
            grid=grid,
            in_specs=[
                pl.BlockSpec((rb, width), lambda i: (i, 0)),   # packed x tile
                resident(pw[0]), resident(pb[0]),
                resident(pw[1]), resident(pb[1]),
                resident(pw[2]), resident(pb[2]),
                resident(pw[3]), resident(pb[3]),
            ],
            out_specs=pl.BlockSpec((rb, width), lambda i: (i, 0)),
        ),
        compiler_params=pltpu.CompilerParams(
            dimension_semantics=("parallel",),
            vmem_limit_bytes=vmem_limit),
    )(x_packed, pw[0], pb[0], pw[1], pb[1], pw[2], pb[2], pw[3], pb[3])

    out = out_packed.reshape(b_pad, d_pad)
    if b_pad != B or d_pad != input_dim:
        out = out[:B, :input_dim]
    return out


def init_params(key, input_dim, encoding_dim):
    """Mimics torch.nn.Linear init: uniform(-1/sqrt(fan_in), 1/sqrt(fan_in)).
    Weights stored as (in, out), biases as (1, out)."""
    dims = [(input_dim, 9), (9, encoding_dim), (encoding_dim, 9), (9, input_dim)]
    params = {}
    for idx, (fan_in, fan_out) in enumerate(dims, start=1):
        key, kw, kb = jax.random.split(key, 3)
        bound = 1.0 / np.sqrt(fan_in)
        params[f"w{idx}"] = jax.random.uniform(
            kw, (fan_in, fan_out), jnp.float32, -bound, bound)
        params[f"b{idx}"] = jax.random.uniform(
            kb, (1, fan_out), jnp.float32, -bound, bound)
    return params


def reference_forward(x, params):
    h = x.astype(jnp.float32)
    for idx in range(1, 5):
        h = jnp.dot(h, params[f"w{idx}"],
                    preferred_element_type=jnp.float32) + params[f"b{idx}"]
        h = jnp.where(h >= 0, h, NEG_SLOPE * h)
    return h


if __name__ == "__main__":
    input_dim, encoding_dim = 16, 4
    key = jax.random.PRNGKey(0)
    key, kp, k1, k2, k3, kp2 = jax.random.split(key, 6)
    params = init_params(kp, input_dim, encoding_dim)

    # 1) f32, batch is a multiple of the packing factor -> zero extra HBM passes,
    #    4-step grid (block_batch=256 samples -> 32-row tiles).
    x1 = jax.random.normal(k1, (1024, input_dim), jnp.float32)
    out1 = jax.block_until_ready(autoencoder_forward(x1, params, block_batch=256))
    np.testing.assert_allclose(np.asarray(out1),
                               np.asarray(reference_forward(x1, params)),
                               rtol=1e-5, atol=1e-5)

    # 2) f32, batch NOT a multiple of the packing factor -> minimal pad + ragged
    #    final grid block.
    x2 = jax.random.normal(k2, (1003, input_dim), jnp.float32)
    out2 = jax.block_until_ready(autoencoder_forward(x2, params))
    np.testing.assert_allclose(np.asarray(out2),
                               np.asarray(reference_forward(x2, params)),
                               rtol=1e-5, atol=1e-5)

    # 3) bf16 producer + awkward feature dim (17 -> padded to 18): bf16 operands
    #    go straight to the MXU, 2-step grid, bf16 output.
    params17 = init_params(kp2, 17, encoding_dim)
    x3 = jax.random.normal(k3, (2048, 17), jnp.float32).astype(jnp.bfloat16)
    out3 = jax.block_until_ready(autoencoder_forward(x3, params17))
    ref3 = reference_forward(x3.astype(jnp.float32), params17)
    np.testing.assert_allclose(np.asarray(out3.astype(jnp.float32)),
                               np.asarray(ref3), rtol=5e-2, atol=1e-1)

    print("KERNEL_OK")
</pallas_src>

<mosaic_0001>
module attributes {stable_mosaic.version = 11 : i64} {
  func.func @kernel(%arg0: i32, %arg1: memref<32x128xf32, #tpu.memory_space<vmem>>, %arg2: memref<128x72xf32, #tpu.memory_space<vmem>>, %arg3: memref<1x72xf32, #tpu.memory_space<vmem>>, %arg4: memref<72x32xf32, #tpu.memory_space<vmem>>, %arg5: memref<1x32xf32, #tpu.memory_space<vmem>>, %arg6: memref<32x72xf32, #tpu.memory_space<vmem>>, %arg7: memref<1x72xf32, #tpu.memory_space<vmem>>, %arg8: memref<72x128xf32, #tpu.memory_space<vmem>>, %arg9: memref<1x128xf32, #tpu.memory_space<vmem>>, %arg10: memref<32x128xf32, #tpu.memory_space<vmem>>) attributes {dimension_semantics = [#tpu.dimension_semantics<parallel>], iteration_bounds = array<i64: 4>, scalar_prefetch = 0 : i64, scratch_operands = 0 : i64, tpu.core_type = #tpu.core_type<tc>, window_params = [{transform_indices = @transform_0, window_bounds = array<i64: 32, 128>}, {pipeline_mode = #tpu.pipeline_mode<synchronous>, transform_indices = @transform_1, window_bounds = array<i64: 128, 72>}, {pipeline_mode = #tpu.pipeline_mode<synchronous>, transform_indices = @transform_2, window_bounds = array<i64: 1, 72>}, {pipeline_mode = #tpu.pipeline_mode<synchronous>, transform_indices = @transform_3, window_bounds = array<i64: 72, 32>}, {pipeline_mode = #tpu.pipeline_mode<synchronous>, transform_indices = @transform_4, window_bounds = array<i64: 1, 32>}, {pipeline_mode = #tpu.pipeline_mode<synchronous>, transform_indices = @transform_5, window_bounds = array<i64: 32, 72>}, {pipeline_mode = #tpu.pipeline_mode<synchronous>, transform_indices = @transform_6, window_bounds = array<i64: 1, 72>}, {pipeline_mode = #tpu.pipeline_mode<synchronous>, transform_indices = @transform_7, window_bounds = array<i64: 72, 128>}, {pipeline_mode = #tpu.pipeline_mode<synchronous>, transform_indices = @transform_8, window_bounds = array<i64: 1, 128>}, {transform_indices = @transform_9, window_bounds = array<i64: 32, 128>}]} {
    %c0 = arith.constant 0 : index
    %c0_0 = arith.constant 0 : index
    %0 = vector.load %arg1[%c0, %c0_0] : memref<32x128xf32, #tpu.memory_space<vmem>>, vector<32x128xf32>
    %c0_1 = arith.constant 0 : index
    %c0_2 = arith.constant 0 : index
    %1 = vector.load %arg2[%c0_1, %c0_2] : memref<128x72xf32, #tpu.memory_space<vmem>>, vector<128x72xf32>
    %cst = arith.constant dense<0.000000e+00> : vector<32x72xf32>
    %2 = tpu.matmul %0, %1, %cst {dimension_numbers = #tpu.dot_dimension_numbers<[1], [0], [0], [1], [0, 0, 1, 1], [], []>} : vector<32x128xf32>, vector<128x72xf32>, vector<32x72xf32> -> vector<32x72xf32>
    %c0_3 = arith.constant 0 : index
    %c0_4 = arith.constant 0 : index
    %3 = vector.load %arg3[%c0_3, %c0_4] : memref<1x72xf32, #tpu.memory_space<vmem>>, vector<1x72xf32>
    %4 = vector.broadcast %3 : vector<1x72xf32> to vector<32x72xf32>
    %5 = arith.addf %2, %4 : vector<32x72xf32>
    %cst_5 = arith.constant 0.000000e+00 : f32
    %6 = vector.broadcast %cst_5 : f32 to vector<32x72xf32>
    %7 = arith.cmpf oge, %5, %6 : vector<32x72xf32>
    %cst_6 = arith.constant 0.00999999977 : f32
    %8 = vector.broadcast %cst_6 : f32 to vector<32x72xf32>
    %9 = arith.mulf %8, %5 : vector<32x72xf32>
    %10 = arith.select %7, %5, %9 : vector<32x72xi1>, vector<32x72xf32>
    %c0_7 = arith.constant 0 : index
    %c0_8 = arith.constant 0 : index
    %11 = vector.load %arg4[%c0_7, %c0_8] : memref<72x32xf32, #tpu.memory_space<vmem>>, vector<72x32xf32>
    %cst_9 = arith.constant dense<0.000000e+00> : vector<32x32xf32>
    %12 = tpu.matmul %10, %11, %cst_9 {dimension_numbers = #tpu.dot_dimension_numbers<[1], [0], [0], [1], [0, 0, 1, 1], [], []>} : vector<32x72xf32>, vector<72x32xf32>, vector<32x32xf32> -> vector<32x32xf32>
    %c0_10 = arith.constant 0 : index
    %c0_11 = arith.constant 0 : index
    %13 = vector.load %arg5[%c0_10, %c0_11] : memref<1x32xf32, #tpu.memory_space<vmem>>, vector<1x32xf32>
    %14 = vector.broadcast %13 : vector<1x32xf32> to vector<32x32xf32>
    %15 = arith.addf %12, %14 : vector<32x32xf32>
    %cst_12 = arith.constant 0.000000e+00 : f32
    %16 = vector.broadcast %cst_12 : f32 to vector<32x32xf32>
    %17 = arith.cmpf oge, %15, %16 : vector<32x32xf32>
    %cst_13 = arith.constant 0.00999999977 : f32
    %18 = vector.broadcast %cst_13 : f32 to vector<32x32xf32>
    %19 = arith.mulf %18, %15 : vector<32x32xf32>
    %20 = arith.select %17, %15, %19 : vector<32x32xi1>, vector<32x32xf32>
    %c0_14 = arith.constant 0 : index
    %c0_15 = arith.constant 0 : index
    %21 = vector.load %arg6[%c0_14, %c0_15] : memref<32x72xf32, #tpu.memory_space<vmem>>, vector<32x72xf32>
    %cst_16 = arith.constant dense<0.000000e+00> : vector<32x72xf32>
    %22 = tpu.matmul %20, %21, %cst_16 {dimension_numbers = #tpu.dot_dimension_numbers<[1], [0], [0], [1], [0, 0, 1, 1], [], []>} : vector<32x32xf32>, vector<32x72xf32>, vector<32x72xf32> -> vector<32x72xf32>
    %c0_17 = arith.constant 0 : index
    %c0_18 = arith.constant 0 : index
    %23 = vector.load %arg7[%c0_17, %c0_18] : memref<1x72xf32, #tpu.memory_space<vmem>>, vector<1x72xf32>
    %24 = vector.broadcast %23 : vector<1x72xf32> to vector<32x72xf32>
    %25 = arith.addf %22, %24 : vector<32x72xf32>
    %cst_19 = arith.constant 0.000000e+00 : f32
    %26 = vector.broadcast %cst_19 : f32 to vector<32x72xf32>
    %27 = arith.cmpf oge, %25, %26 : vector<32x72xf32>
    %cst_20 = arith.constant 0.00999999977 : f32
    %28 = vector.broadcast %cst_20 : f32 to vector<32x72xf32>
    %29 = arith.mulf %28, %25 : vector<32x72xf32>
    %30 = arith.select %27, %25, %29 : vector<32x72xi1>, vector<32x72xf32>
    %c0_21 = arith.constant 0 : index
    %c0_22 = arith.constant 0 : index
    %31 = vector.load %arg8[%c0_21, %c0_22] : memref<72x128xf32, #tpu.memory_space<vmem>>, vector<72x128xf32>
    %cst_23 = arith.constant dense<0.000000e+00> : vector<32x128xf32>
    %32 = tpu.matmul %30, %31, %cst_23 {dimension_numbers = #tpu.dot_dimension_numbers<[1], [0], [0], [1], [0, 0, 1, 1], [], []>} : vector<32x72xf32>, vector<72x128xf32>, vector<32x128xf32> -> vector<32x128xf32>
    %c0_24 = arith.constant 0 : index
    %c0_25 = arith.constant 0 : index
    %33 = vector.load %arg9[%c0_24, %c0_25] : memref<1x128xf32, #tpu.memory_space<vmem>>, vector<1x128xf32>
    %34 = vector.broadcast %33 : vector<1x128xf32> to vector<32x128xf32>
    %35 = arith.addf %32, %34 : vector<32x128xf32>
    %cst_26 = arith.constant 0.000000e+00 : f32
    %36 = vector.broadcast %cst_26 : f32 to vector<32x128xf32>
    %37 = arith.cmpf oge, %35, %36 : vector<32x128xf32>
    %cst_27 = arith.constant 0.00999999977 : f32
    %38 = vector.broadcast %cst_27 : f32 to vector<32x128xf32>
    %39 = arith.mulf %38, %35 : vector<32x128xf32>
    %40 = arith.select %37, %35, %39 : vector<32x128xi1>, vector<32x128xf32>
    %c0_28 = arith.constant 0 : index
    %c0_29 = arith.constant 0 : index
    %41 = vector.load %arg10[%c0_28, %c0_29] : memref<32x128xf32, #tpu.memory_space<vmem>>, vector<32x128xf32>
    tpu.vector_store %arg10[%c0_28, %c0_29], %40 {strides = array<i32>} : memref<32x128xf32, #tpu.memory_space<vmem>>, vector<32x128xf32>,
    return
  }
  func.func @transform_0(%arg0: i32) -> (i32, i32) {
    %c0_i32 = arith.constant 0 : i32
    %c0_i32_0 = arith.constant 0 : i32
    return %arg0, %c0_i32 : i32, i32
  }
  func.func @transform_1(%arg0: i32) -> (i32, i32) {
    %c0_i32 = arith.constant 0 : i32
    %c0_i32_0 = arith.constant 0 : i32
    %c0_i32_1 = arith.constant 0 : i32
    return %c0_i32, %c0_i32_0 : i32, i32
  }
  func.func @transform_2(%arg0: i32) -> (i32, i32) {
    %c0_i32 = arith.constant 0 : i32
    %c0_i32_0 = arith.constant 0 : i32
    %c0_i32_1 = arith.constant 0 : i32
    return %c0_i32, %c0_i32_0 : i32, i32
  }
  func.func @transform_3(%arg0: i32) -> (i32, i32) {
    %c0_i32 = arith.constant 0 : i32
    %c0_i32_0 = arith.constant 0 : i32
    %c0_i32_1 = arith.constant 0 : i32
    return %c0_i32, %c0_i32_0 : i32, i32
  }
  func.func @transform_4(%arg0: i32) -> (i32, i32) {
    %c0_i32 = arith.constant 0 : i32
    %c0_i32_0 = arith.constant 0 : i32
    %c0_i32_1 = arith.constant 0 : i32
    return %c0_i32, %c0_i32_0 : i32, i32
  }
  func.func @transform_5(%arg0: i32) -> (i32, i32) {
    %c0_i32 = arith.constant 0 : i32
    %c0_i32_0 = arith.constant 0 : i32
    %c0_i32_1 = arith.constant 0 : i32
    return %c0_i32, %c0_i32_0 : i32, i32
  }
  func.func @transform_6(%arg0: i32) -> (i32, i32) {
    %c0_i32 = arith.constant 0 : i32
    %c0_i32_0 = arith.constant 0 : i32
    %c0_i32_1 = arith.constant 0 : i32
    return %c0_i32, %c0_i32_0 : i32, i32
  }
  func.func @transform_7(%arg0: i32) -> (i32, i32) {
    %c0_i32 = arith.constant 0 : i32
    %c0_i32_0 = arith.constant 0 : i32
    %c0_i32_1 = arith.constant 0 : i32
    return %c0_i32, %c0_i32_0 : i32, i32
  }
  func.func @transform_8(%arg0: i32) -> (i32, i32) {
    %c0_i32 = arith.constant 0 : i32
    %c0_i32_0 = arith.constant 0 : i32
    %c0_i32_1 = arith.constant 0 : i32
    return %c0_i32, %c0_i32_0 : i32, i32
  }
  func.func @transform_9(%arg0: i32) -> (i32, i32) {
    %c0_i32 = arith.constant 0 : i32
    %c0_i32_0 = arith.constant 0 : i32
    return %arg0, %c0_i32 : i32, i32
  }
}

</mosaic_0001>

<llo_original>
// kernel: tpu_custom_call.1
$region0: #{tpu_custom_call.1}
  #allocation0 [shape = 'u32[]', space=smem, size = 0x4, offset = 0x4, fixed_abs, tag = 'smem constant byte address 0x4 - core index']
  #allocation1 [shape = 'u32[144,128]{1,0:T(1,128)}', space=vmem, size = 0x12000, scoped, tag = 'internal scratch']
  %s0 = inlined_call_operand.vmem [shape: f32[128,128], index: 0, kind: input, shape index: {}]
  %s1 = inlined_call_operand.vmem [shape: f32[128,72], index: 1, kind: input, shape index: {}]
  %s2 = inlined_call_operand.vmem [shape: f32[1,72], index: 2, kind: input, shape index: {}]
  %s3 = inlined_call_operand.vmem [shape: f32[72,32], index: 3, kind: input, shape index: {}]
  %s4 = inlined_call_operand.vmem [shape: f32[1,32], index: 4, kind: input, shape index: {}]
  %s5 = inlined_call_operand.vmem [shape: f32[32,72], index: 5, kind: input, shape index: {}]
  %s6 = inlined_call_operand.vmem [shape: f32[1,72], index: 6, kind: input, shape index: {}]
  %s7 = inlined_call_operand.vmem [shape: f32[72,128], index: 7, kind: input, shape index: {}]
  %s8 = inlined_call_operand.vmem [shape: f32[1,128], index: 8, kind: input, shape index: {}]
  %s9 = inlined_call_operand.hbm [shape: f32[128,128], index: 9, kind: output, shape index: {}]
  %s10 = sld [smem:[#allocation0]]
  $region69: #{tpu_custom_call.1} parent=0
    _
  %s12 = ssub.s32 1, %s10
  %s13 = scalar_select 0, %s12, %s10
  $region1: #{tpu_custom_call.1} parent=0
    #allocation2 [shape = 'u8[32768]{0}', space=vmem, size = 0x8000, scoped, tag = 'output window, operand 0']
    #allocation3 [shape = 's32[2]{0}', space=sflag, size = 0x8, scoped, tag = 'scoped memory for tpu_custom_call.1']
    %14 = vsyncpa [#allocation3], 0
    %s15 = scalar_lea.sflag [#allocation3], 1
    %16 = vsyncpa %s15, 0
    loop: start=0, step=1, limit=6
    $region2: #{tpu_custom_call.1} parent=1 // loop_pre_header
      _
    $region3: #{tpu_custom_call.1} parent=1 // loop_header
      %s18 = sphi 0, %s22
      %p19 = scmp.ge.s32.totalorder %s18, 6
      %s28 = sphi 0, %s30
      %s31 = sphi 0, %s28
      %s32 = sphi 0, %s31
      %s48 = sphi 0, %s32
      %s52 = sphi 0, %s52
      %s54 = sphi 0, %s52
      %s55 = sphi 0, %s54
      %s69 = sphi 0, %s55
      %s73 = sphi 0, %s73
      %s75 = sphi 0, %s73
      %s76 = sphi 0, %s75
      %s90 = sphi 0, %s76
      %s94 = sphi 0, %s94
      %s96 = sphi 0, %s94
      %s97 = sphi 0, %s96
      %s111 = sphi 0, %s97
      %s115 = sphi 0, %s115
      %s117 = sphi 0, %s115
      %s118 = sphi 0, %s117
      %s132 = sphi 0, %s118
      %s136 = sphi 0, %s136
      %s138 = sphi 0, %s136
      %s139 = sphi 0, %s138
      %s153 = sphi 0, %s139
      %s157 = sphi 0, %s157
      %s159 = sphi 0, %s157
      %s160 = sphi 0, %s159
      %s174 = sphi 0, %s160
      %s178 = sphi 0, %s178
      %s180 = sphi 0, %s178
      %s181 = sphi 0, %s180
      %s195 = sphi 0, %s181
      %s199 = sphi 0, %s199
      %s201 = sphi 0, %s199
      %s202 = sphi 0, %s201
      %s216 = sphi 0, %s202
      %s222 = sphi 0, %s224
      %s225 = sphi 0, %s222
      %s226 = sphi 0, %s225
      %s242 = sphi 0, %s226
    $region4: #{tpu_custom_call.1} parent=1 // loop_header_branch
      %21 = sbr.rel (%p19) target = $region8
    $region5: #{tpu_custom_call.1} parent=1 // loop_body
      %s23 = ssub.s32 %s18, 1
      %s24 = ssub.s32 %s18, 2
      %s25 = sadd.s32 %s18, 1
      %s26 = ssub.s32 %s18, %s25
      %p27 = scmp.eq.s32.totalorder %s26, 0
      %s29 = sadd.s32 %s28, 1
      %s30 = scalar_select %p27, %s28, %s29
      %p33 = pneg %p27
      %p34 = scmp.eq.s32.totalorder %s18, 3
      %p35 = por %p33, %p34
      %p36 = scmp.ne.s32.totalorder %s28, %s31
      %p37 = scmp.eq.s32.totalorder %s18, 0
      %p38 = por %p36, %p37
      %p39 = scmp.ne.s32.totalorder %s28, %s31
      %p40 = scmp.eq.s32.totalorder %s23, 3
      %p41 = por %p39, %p40
      %p42 = scmp.ne.s32.totalorder %s31, %s32
      %p43 = scmp.eq.s32.totalorder %s23, 0
      %p44 = por %p42, %p43
      %p45 = scmp.ne.s32.totalorder %s31, %s32
      %p46 = scmp.eq.s32.totalorder %s24, 3
      %p47 = por %p45, %p46
      %p49 = scmp.ne.s32.totalorder %s32, %s48
      %p50 = scmp.eq.s32.totalorder %s24, 0
      %p51 = por %p49, %p50
      %s53 = sadd.s32 %s52, 1
      %p56 = scmp.eq.s32.totalorder %s18, 3
      %p57 = scmp.ne.s32.totalorder %s52, %s54
      %p58 = scmp.eq.s32.totalorder %s18, 0
      %p59 = por %p57, %p58
      %p60 = scmp.ne.s32.totalorder %s52, %s54
      %p61 = scmp.eq.s32.totalorder %s23, 3
      %p62 = por %p60, %p61
      %p63 = scmp.ne.s32.totalorder %s54, %s55
      %p64 = scmp.eq.s32.totalorder %s23, 0
      %p65 = por %p63, %p64
      %p66 = scmp.ne.s32.totalorder %s54, %s55
      %p67 = scmp.eq.s32.totalorder %s24, 3
      %p68 = por %p66, %p67
      %p70 = scmp.ne.s32.totalorder %s55, %s69
      %p71 = scmp.eq.s32.totalorder %s24, 0
      %p72 = por %p70, %p71
      %s74 = sadd.s32 %s73, 1
      %p77 = scmp.eq.s32.totalorder %s18, 3
      %p78 = scmp.ne.s32.totalorder %s73, %s75
      %p79 = scmp.eq.s32.totalorder %s18, 0
      %p80 = por %p78, %p79
      %p81 = scmp.ne.s32.totalorder %s73, %s75
      %p82 = scmp.eq.s32.totalorder %s23, 3
      %p83 = por %p81, %p82
      %p84 = scmp.ne.s32.totalorder %s75, %s76
      %p85 = scmp.eq.s32.totalorder %s23, 0
      %p86 = por %p84, %p85
      %p87 = scmp.ne.s32.totalorder %s75, %s76
      %p88 = scmp.eq.s32.totalorder %s24, 3
      %p89 = por %p87, %p88
      %p91 = scmp.ne.s32.totalorder %s76, %s90
      %p92 = scmp.eq.s32.totalorder %s24, 0
      %p93 = por %p91, %p92
      %s95 = sadd.s32 %s94, 1
      %p98 = scmp.eq.s32.totalorder %s18, 3
      %p99 = scmp.ne.s32.totalorder %s94, %s96
      %p100 = scmp.eq.s32.totalorder %s18, 0
      %p101 = por %p99, %p100
      %p102 = scmp.ne.s32.totalorder %s94, %s96
      %p103 = scmp.eq.s32.totalorder %s23, 3
      %p104 = por %p102, %p103
      %p105 = scmp.ne.s32.totalorder %s96, %s97
      %p106 = scmp.eq.s32.totalorder %s23, 0
      %p107 = por %p105, %p106
      %p108 = scmp.ne.s32.totalorder %s96, %s97
      %p109 = scmp.eq.s32.totalorder %s24, 3
      %p110 = por %p108, %p109
      %p112 = scmp.ne.s32.totalorder %s97, %s111
      %p113 = scmp.eq.s32.totalorder %s24, 0
      %p114 = por %p112, %p113
      %s116 = sadd.s32 %s115, 1
      %p119 = scmp.eq.s32.totalorder %s18, 3
      %p120 = scmp.ne.s32.totalorder %s115, %s117
      %p121 = scmp.eq.s32.totalorder %s18, 0
      %p122 = por %p120, %p121
      %p123 = scmp.ne.s32.totalorder %s115, %s117
      %p124 = scmp.eq.s32.totalorder %s23, 3
      %p125 = por %p123, %p124
      %p126 = scmp.ne.s32.totalorder %s117, %s118
      %p127 = scmp.eq.s32.totalorder %s23, 0
      %p128 = por %p126, %p127
      %p129 = scmp.ne.s32.totalorder %s117, %s118
      %p130 = scmp.eq.s32.totalorder %s24, 3
      %p131 = por %p129, %p130
      %p133 = scmp.ne.s32.totalorder %s118, %s132
      %p134 = scmp.eq.s32.totalorder %s24, 0
      %p135 = por %p133, %p134
      %s137 = sadd.s32 %s136, 1
      %p140 = scmp.eq.s32.totalorder %s18, 3
      %p141 = scmp.ne.s32.totalorder %s136, %s138
      %p142 = scmp.eq.s32.totalorder %s18, 0
      %p143 = por %p141, %p142
      %p144 = scmp.ne.s32.totalorder %s136, %s138
      %p145 = scmp.eq.s32.totalorder %s23, 3
      %p146 = por %p144, %p145
      %p147 = scmp.ne.s32.totalorder %s138, %s139
      %p148 = scmp.eq.s32.totalorder %s23, 0
      %p149 = por %p147, %p148
      %p150 = scmp.ne.s32.totalorder %s138, %s139
      %p151 = scmp.eq.s32.totalorder %s24, 3
      %p152 = por %p150, %p151
      %p154 = scmp.ne.s32.totalorder %s139, %s153
      %p155 = scmp.eq.s32.totalorder %s24, 0
      %p156 = por %p154, %p155
      %s158 = sadd.s32 %s157, 1
      %p161 = scmp.eq.s32.totalorder %s18, 3
      %p162 = scmp.ne.s32.totalorder %s157, %s159
      %p163 = scmp.eq.s32.totalorder %s18, 0
      %p164 = por %p162, %p163
      %p165 = scmp.ne.s32.totalorder %s157, %s159
      %p166 = scmp.eq.s32.totalorder %s23, 3
      %p167 = por %p165, %p166
      %p168 = scmp.ne.s32.totalorder %s159, %s160
      %p169 = scmp.eq.s32.totalorder %s23, 0
      %p170 = por %p168, %p169
      %p171 = scmp.ne.s32.totalorder %s159, %s160
      %p172 = scmp.eq.s32.totalorder %s24, 3
      %p173 = por %p171, %p172
      %p175 = scmp.ne.s32.totalorder %s160, %s174
      %p176 = scmp.eq.s32.totalorder %s24, 0
      %p177 = por %p175, %p176
      %s179 = sadd.s32 %s178, 1
      %p182 = scmp.eq.s32.totalorder %s18, 3
      %p183 = scmp.ne.s32.totalorder %s178, %s180
      %p184 = scmp.eq.s32.totalorder %s18, 0
      %p185 = por %p183, %p184
      %p186 = scmp.ne.s32.totalorder %s178, %s180
      %p187 = scmp.eq.s32.totalorder %s23, 3
      %p188 = por %p186, %p187
      %p189 = scmp.ne.s32.totalorder %s180, %s181
      %p190 = scmp.eq.s32.totalorder %s23, 0
      %p191 = por %p189, %p190
      %p192 = scmp.ne.s32.totalorder %s180, %s181
      %p193 = scmp.eq.s32.totalorder %s24, 3
      %p194 = por %p192, %p193
      %p196 = scmp.ne.s32.totalorder %s181, %s195
      %p197 = scmp.eq.s32.totalorder %s24, 0
      %p198 = por %p196, %p197
      %s200 = sadd.s32 %s199, 1
      %p203 = scmp.eq.s32.totalorder %s18, 3
      %p204 = scmp.ne.s32.totalorder %s199, %s201
      %p205 = scmp.eq.s32.totalorder %s18, 0
      %p206 = por %p204, %p205
      %p207 = scmp.ne.s32.totalorder %s199, %s201
      %p208 = scmp.eq.s32.totalorder %s23, 3
      %p209 = por %p207, %p208
      %p210 = scmp.ne.s32.totalorder %s201, %s202
      %p211 = scmp.eq.s32.totalorder %s23, 0
      %p212 = por %p210, %p211
      %p213 = scmp.ne.s32.totalorder %s201, %s202
      %p214 = scmp.eq.s32.totalorder %s24, 3
      %p215 = por %p213, %p214
      %p217 = scmp.ne.s32.totalorder %s202, %s216
      %p218 = scmp.eq.s32.totalorder %s24, 0
      %p219 = por %p217, %p218
      %s220 = ssub.s32 %s18, %s25
      %p221 = scmp.eq.s32.totalorder %s220, 0
      %s223 = sadd.s32 %s222, 1
      %s224 = scalar_select %p221, %s222, %s223
      %p227 = pneg %p221
      %p228 = scmp.eq.s32.totalorder %s18, 3
      %p229 = por %p227, %p228
      %p230 = scmp.ne.s32.totalorder %s222, %s225
      %p231 = scmp.eq.s32.totalorder %s18, 0
      %p232 = por %p230, %p231
      %p233 = scmp.ne.s32.totalorder %s222, %s225
      %p234 = scmp.eq.s32.totalorder %s23, 3
      %p235 = por %p233, %p234
      %p236 = scmp.ne.s32.totalorder %s225, %s226
      %p237 = scmp.eq.s32.totalorder %s23, 0
      %p238 = por %p236, %p237
      %p239 = scmp.ne.s32.totalorder %s225, %s226
      %p240 = scmp.eq.s32.totalorder %s24, 3
      %p241 = por %p239, %p240
      %p243 = scmp.ne.s32.totalorder %s226, %s242
      %p244 = scmp.eq.s32.totalorder %s24, 0
      %p245 = por %p243, %p244
      %p246 = scmp.le.s32.totalorder 1, %s18
      %p247 = scmp.lt.s32.totalorder %s18, 5
      %p248 = pnand %p246, %p247
      %p249 = pneg %p248
      // Predicated region
      $region9: #{tpu_custom_call.1} parent=5 // pred_check
        _
      $region10: #{tpu_custom_call.1} parent=5 // pred_check_branch
        %251 = sbr.rel (%p248) target = $region12
      $region11: #{tpu_custom_call.1} parent=5 // pred_region
        %s252 = ssub.s32 %s18, 1
        // Predicated region
        $region13: #{tpu_custom_call.1} parent=11 // pred_check
          %p253 = pneg %p65
        $region14: #{tpu_custom_call.1} parent=11 // pred_check_branch
          %255 = sbr.rel (%p253) target = $region16
        $region15: #{tpu_custom_call.1} parent=11 // pred_region
          _
        $region16: #{tpu_custom_call.1} parent=11 // pred_fallthru
          _
        // Predicated region
        $region17: #{tpu_custom_call.1} parent=11 // pred_check
          %p256 = pneg %p86
        $region18: #{tpu_custom_call.1} parent=11 // pred_check_branch
          %258 = sbr.rel (%p256) target = $region20
        $region19: #{tpu_custom_call.1} parent=11 // pred_region
          _
        $region20: #{tpu_custom_call.1} parent=11 // pred_fallthru
          _
        // Predicated region
        $region21: #{tpu_custom_call.1} parent=11 // pred_check
          %p259 = pneg %p107
        $region22: #{tpu_custom_call.1} parent=11 // pred_check_branch
          %261 = sbr.rel (%p259) target = $region24
        $region23: #{tpu_custom_call.1} parent=11 // pred_region
          _
        $region24: #{tpu_custom_call.1} parent=11 // pred_fallthru
          _
        // Predicated region
        $region25: #{tpu_custom_call.1} parent=11 // pred_check
          %p262 = pneg %p128
        $region26: #{tpu_custom_call.1} parent=11 // pred_check_branch
          %264 = sbr.rel (%p262) target = $region28
        $region27: #{tpu_custom_call.1} parent=11 // pred_region
          _
        $region28: #{tpu_custom_call.1} parent=11 // pred_fallthru
          _
        // Predicated region
        $region29: #{tpu_custom_call.1} parent=11 // pred_check
          %p265 = pneg %p149
        $region30: #{tpu_custom_call.1} parent=11 // pred_check_branch
          %267 = sbr.rel (%p265) target = $region32
        $region31: #{tpu_custom_call.1} parent=11 // pred_region
          _
        $region32: #{tpu_custom_call.1} parent=11 // pred_fallthru
          _
        // Predicated region
        $region33: #{tpu_custom_call.1} parent=11 // pred_check
          %p268 = pneg %p170
        $region34: #{tpu_custom_call.1} parent=11 // pred_check_branch
          %270 = sbr.rel (%p268) target = $region36
        $region35: #{tpu_custom_call.1} parent=11 // pred_region
          _
        $region36: #{tpu_custom_call.1} parent=11 // pred_fallthru
          _
        // Predicated region
        $region37: #{tpu_custom_call.1} parent=11 // pred_check
          %p271 = pneg %p191
        $region38: #{tpu_custom_call.1} parent=11 // pred_check_branch
          %273 = sbr.rel (%p271) target = $region40
        $region39: #{tpu_custom_call.1} parent=11 // pred_region
          _
        $region40: #{tpu_custom_call.1} parent=11 // pred_fallthru
          _
        // Predicated region
        $region41: #{tpu_custom_call.1} parent=11 // pred_check
          %p274 = pneg %p212
        $region42: #{tpu_custom_call.1} parent=11 // pred_check_branch
          %276 = sbr.rel (%p274) target = $region44
        $region43: #{tpu_custom_call.1} parent=11 // pred_region
          _
        $region44: #{tpu_custom_call.1} parent=11 // pred_fallthru
          _
      $region12: #{tpu_custom_call.1} parent=5 // pred_fallthru
        _
      %p277 = scmp.lt.s32.totalorder %s18, 4
      // Predicated region
      $region45: #{tpu_custom_call.1} parent=5 // pred_check
        %p278 = pneg %p277
      $region46: #{tpu_custom_call.1} parent=5 // pred_check_branch
        %280 = sbr.rel (%p278) target = $region48
      $region47: #{tpu_custom_call.1} parent=5 // pred_region
        // Predicated region
        $region49: #{tpu_custom_call.1} parent=47 // pred_check
          %p281 = pneg %p38
        $region50: #{tpu_custom_call.1} parent=47 // pred_check_branch
          %283 = sbr.rel (%p281) target = $region52
        $region51: #{tpu_custom_call.1} parent=47 // pred_region
          %s284 = smul.u32 4, %s18
          %p285 = scmp.lt.s32.totalorder %s284, 15
          %s286 = scalar_select %p285, %s284, 15
          %s287 = smul.addr %s286, 8
          %s288 = scalar_lea.vmem %s0, %s287
          %s289 = smul.u32 4, %s18
        $region52: #{tpu_custom_call.1} parent=47 // pred_fallthru
          _
      $region48: #{tpu_custom_call.1} parent=5 // pred_fallthru
        _
      %p290 = scmp.le.s32.totalorder 1, %s18
      %p291 = scmp.lt.s32.totalorder %s18, 5
      %p292 = pnand %p290, %p291
      %p293 = pneg %p292
      // Predicated region
      $region53: #{tpu_custom_call.1} parent=5 // pred_check
        _
      $region54: #{tpu_custom_call.1} parent=5 // pred_check_branch
        %295 = sbr.rel (%p292) target = $region56
      $region55: #{tpu_custom_call.1} parent=5 // pred_region
        %s296 = ssub.s32 %s18, 1
        %s297 = smul.u32 4, %s23
        %p298 = scmp.lt.s32.totalorder %s297, 15
        %s299 = scalar_select %p298, %s297, 15
        %s300 = smul.addr %s299, 8
        %s301 = scalar_lea.vmem %s0, %s300
        %p302 = pneg %p44
        %p303 = pneg %p41
        %p304 = pneg %p65
        %p305 = pneg %p62
        %p306 = pneg %p86
        %p307 = pneg %p83
        %p308 = pneg %p107
        %p309 = pneg %p104
        %p310 = pneg %p128
        %p311 = pneg %p125
        %p312 = pneg %p149
        %p313 = pneg %p146
        %p314 = pneg %p170
        %p315 = pneg %p167
        %p316 = pneg %p191
        %p317 = pneg %p188
        %p318 = pneg %p212
        %p319 = pneg %p209
        %p320 = pneg %p238
        %p321 = pneg %p235
        %s322 = sand.u32 %s225, 1
        %s323 = scalar_lea.sflag [#allocation3], %s322
        %s324 = sand.u32 %s225, 1
        %s325 = smul.addr %s324, 32
        %s326 = scalar_lea.vmem [#allocation2], %s325
        %s327 = smul.u32 4, %s23
        %p328 = scmp.lt.s32.totalorder %s327, 15
        %s329 = scalar_select %p328, %s327, 15
        %s330 = smul.addr %s329, 8
        %s331 = scalar_lea.vmem %s0, %s330
        %s332 = smul.u32 4, %s23
        %s333 = smul.u32 4, %s23
        %v334 = vld [vmem:[%s331] sm:$0xff]
        %v335 = vld [vmem:[%s331 + $0x8] sm:$0xff]
        %v336 = vld [vmem:[%s331 + $0x10] sm:$0xff]
        %v337 = vld [vmem:[%s331 + $0x18] sm:$0xff]
        %v338 = vld [vmem:[%s1] sm:$0xff]
        %v339 = vld [vmem:[%s1 + $0x8] sm:$0xff]
        %v340 = vld [vmem:[%s1 + $0x10] sm:$0xff]
        %v341 = vld [vmem:[%s1 + $0x18] sm:$0xff]
        %v342 = vld [vmem:[%s1 + $0x20] sm:$0xff]
        %v343 = vld [vmem:[%s1 + $0x28] sm:$0xff]
        %v344 = vld [vmem:[%s1 + $0x30] sm:$0xff]
        %v345 = vld [vmem:[%s1 + $0x38] sm:$0xff]
        %v346 = vld [vmem:[%s1 + $0x40] sm:$0xff]
        %v347 = vld [vmem:[%s1 + $0x48] sm:$0xff]
        %v348 = vld [vmem:[%s1 + $0x50] sm:$0xff]
        %v349 = vld [vmem:[%s1 + $0x58] sm:$0xff]
        %v350 = vld [vmem:[%s1 + $0x60] sm:$0xff]
        %v351 = vld [vmem:[%s1 + $0x68] sm:$0xff]
        %v352 = vld [vmem:[%s1 + $0x70] sm:$0xff]
        %v353 = vld [vmem:[%s1 + $0x78] sm:$0xff]
        %v354 = vld [vmem:[%s2] sm:$0x1]
        %v356 = vlaneseq
        %v357 = vshrl.u32 %v356, 7
        %v358 = vsub.s32 0, %v357
        %v359 = vrot.slane %v354, %v358
        %361 = vmatprep.subr.mxu0 0.0
        %362 = vmatpush1.msra.mxu0 %v338
        %363 = vmatprep.subr.mxu0 0.0
        %364 = vmatpush1.msra.mxu0 %v339
        %365 = vmatprep.subr.mxu0 0.0
        %366 = vmatpush1.msra.mxu0 %v340
        %367 = vmatprep.subr.mxu0 0.0
        %368 = vmatpush1.msra.mxu0 %v341
        %369 = vmatprep.subr.mxu0 0.0
        %370 = vmatpush1.msra.mxu0 %v342
        %371 = vmatprep.subr.mxu0 0.0
        %372 = vmatpush1.msra.mxu0 %v343
        %373 = vmatprep.subr.mxu0 0.0
        %374 = vmatpush1.msra.mxu0 %v344
        %375 = vmatprep.subr.mxu0 0.0
        %376 = vmatpush1.msra.mxu0 %v345
        %377 = vmatprep.subr.mxu0 0.0
        %378 = vmatpush1.msra.mxu0 %v346
        %379 = vmatprep.subr.mxu0 0.0
        %380 = vmatpush1.msra.mxu0 %v347
        %381 = vmatprep.subr.mxu0 0.0
        %382 = vmatpush1.msra.mxu0 %v348
        %383 = vmatprep.subr.mxu0 0.0
        %384 = vmatpush1.msra.mxu0 %v349
        %385 = vmatprep.subr.mxu0 0.0
        %386 = vmatpush1.msra.mxu0 %v350
        %387 = vmatprep.subr.mxu0 0.0
        %388 = vmatpush1.msra.mxu0 %v351
        %389 = vmatprep.subr.mxu0 0.0
        %390 = vmatpush1.msra.mxu0 %v352
        %391 = vmatprep.subr.mxu0 0.0
        %392 = vmatpush1.msra.mxu0 %v353
        %393 = vmatprep.subr.mxu0 0.0
        %394 = vmatpush1.msra.mxu0 0.0
        %395 = vmatprep.subr.mxu0 0.0
        %396 = vmatpush1.msra.mxu0 0.0
        %397 = vmatprep.subr.mxu0 0.0
        %398 = vmatpush1.msra.mxu0 0.0
        %399 = vmatprep.subr.mxu0 0.0
        %400 = vmatpush1.msra.mxu0 0.0
        %401 = vmatprep.subr.mxu0 0.0
        %402 = vmatpush1.msra.mxu0 0.0
        %403 = vmatprep.subr.mxu0 0.0
        %404 = vmatpush1.msra.mxu0 0.0
        %405 = vmatprep.subr.mxu0 0.0
        %406 = vmatpush1.msra.mxu0 0.0
        %407 = vmatprep.subr.mxu0 0.0
        %408 = vmatpush1.msra.mxu0 0.0
        %409 = vmatprep.subr.mxu0 0.0
        %410 = vmatpush1.msra.mxu0 0.0
        %411 = vmatprep.subr.mxu0 0.0
        %412 = vmatpush1.msra.mxu0 0.0
        %413 = vmatprep.subr.mxu0 0.0
        %414 = vmatpush1.msra.mxu0 0.0
        %415 = vmatprep.subr.mxu0 0.0
        %416 = vmatpush1.msra.mxu0 0.0
        %417 = vmatprep.subr.mxu0 0.0
        %418 = vmatpush1.msra.mxu0 0.0
        %419 = vmatprep.subr.mxu0 0.0
        %420 = vmatpush1.msra.mxu0 0.0
        %421 = vmatprep.subr.mxu0 0.0
        %422 = vmatpush1.msra.mxu0 0.0
        %423 = vmatprep.subr.mxu0 0.0
        %424 = vmatpush1.msra.mxu0 0.0
        %425 = vmatprep.mubr.f32.mxu0 0.0
        %426 = vmatmul.mubr.f32.gmra.mrb[0].mxu0 %v334
        %v427 = vpop.f32.mrb[0].mxu0
        %v428 = vadd.f32 %v359, %v427
        %v429 = vpop.f32.mrb[0].mxu0
        %430 = vmatprep.mubr.f32.mxu0 0.0
        %431 = vmatmul.mubr.f32.gmra.mrb[0].mxu0 %v335
        %v432 = vpop.f32.mrb[0].mxu0
        %v433 = vadd.f32 %v359, %v432
        %v434 = vpop.f32.mrb[0].mxu0
        %435 = vmatprep.mubr.f32.mxu0 0.0
        %436 = vmatmul.mubr.f32.gmra.mrb[0].mxu0 %v336
        %v437 = vpop.f32.mrb[0].mxu0
        %v438 = vadd.f32 %v359, %v437
        %v439 = vpop.f32.mrb[0].mxu0
        %440 = vmatprep.mubr.f32.mxu0 0.0
        %441 = vmatmul.mubr.f32.gmra.mrb[0].mxu0 %v337
        %v442 = vpop.f32.mrb[0].mxu0
        %v443 = vadd.f32 %v359, %v442
        %v444 = vpop.f32.mrb[0].mxu0
        %445 = vdwg.mxu0
        %vm446 = vcmp.ge.f32.partialorder %v428, 0.0
        %vm447 = vcmp.ge.f32.partialorder %v433, 0.0
        %vm448 = vcmp.ge.f32.partialorder %v438, 0.0
        %vm449 = vcmp.ge.f32.partialorder %v443, 0.0
        %v450 = vmul.f32 %v428, 0.01
        %v451 = vmul.f32 %v433, 0.01
        %v452 = vmul.f32 %v438, 0.01
        %v453 = vmul.f32 %v443, 0.01
        %v454 = vsel %vm446, %v428, %v450
        %v455 = vsel %vm447, %v433, %v451
        %v456 = vsel %vm448, %v438, %v452
        %v457 = vsel %vm449, %v443, %v453
        %v458 = vld [vmem:[%s3] sm:$0xff]
        %v459 = vld [vmem:[%s3 + $0x8] sm:$0xff]
        %v460 = vld [vmem:[%s3 + $0x10] sm:$0xff]
        %v461 = vld [vmem:[%s3 + $0x18] sm:$0xff]
        %v462 = vld [vmem:[%s3 + $0x20] sm:$0xff]
        %v463 = vld [vmem:[%s3 + $0x28] sm:$0xff]
        %v464 = vld [vmem:[%s3 + $0x30] sm:$0xff]
        %v465 = vld [vmem:[%s3 + $0x38] sm:$0xff]
        %v466 = vld [vmem:[%s3 + $0x40] sm:$0xff]
        %v467 = vld [vmem:[%s4] sm:$0x1]
        %v469 = vlaneseq
        %v470 = vshrl.u32 %v469, 7
        %v471 = vsub.s32 0, %v470
        %v472 = vrot.slane %v467, %v471
        %vm474 = vcmask 588800
        %v476 = vsel %vm474, %v454, 0
        %v479 = vsel %vm474, %v455, 0
        %v482 = vsel %vm474, %v456, 0
        %v485 = vsel %vm474, %v457, 0
        %487 = vmatprep.subr.mxu0 0.0
        %488 = vmatpush1.msra.mxu0 %v458
        %489 = vmatprep.subr.mxu0 0.0
        %490 = vmatpush1.msra.mxu0 %v459
        %491 = vmatprep.subr.mxu0 0.0
        %492 = vmatpush1.msra.mxu0 %v460
        %493 = vmatprep.subr.mxu0 0.0
        %494 = vmatpush1.msra.mxu0 %v461
        %495 = vmatprep.subr.mxu0 0.0
        %496 = vmatpush1.msra.mxu0 %v462
        %497 = vmatprep.subr.mxu0 0.0
        %498 = vmatpush1.msra.mxu0 %v463
        %499 = vmatprep.subr.mxu0 0.0
        %500 = vmatpush1.msra.mxu0 %v464
        %501 = vmatprep.subr.mxu0 0.0
        %502 = vmatpush1.msra.mxu0 %v465
        %503 = vmatprep.subr.mxu0 0.0
        %504 = vmatpush1.msra.mxu0 %v466
        %505 = vmatprep.subr.mxu0 0.0
        %506 = vmatpush1.msra.mxu0 0.0
        %507 = vmatprep.subr.mxu0 0.0
        %508 = vmatpush1.msra.mxu0 0.0
        %509 = vmatprep.subr.mxu0 0.0
        %510 = vmatpush1.msra.mxu0 0.0
        %511 = vmatprep.subr.mxu0 0.0
        %512 = vmatpush1.msra.mxu0 0.0
        %513 = vmatprep.subr.mxu0 0.0
        %514 = vmatpush1.msra.mxu0 0.0
        %515 = vmatprep.subr.mxu0 0.0
        %516 = vmatpush1.msra.mxu0 0.0
        %517 = vmatprep.subr.mxu0 0.0
        %518 = vmatpush1.msra.mxu0 0.0
        %519 = vmatprep.subr.mxu0 0.0
        %520 = vmatpush1.msra.mxu0 0.0
        %521 = vmatprep.subr.mxu0 0.0
        %522 = vmatpush1.msra.mxu0 0.0
        %523 = vmatprep.subr.mxu0 0.0
        %524 = vmatpush1.msra.mxu0 0.0
        %525 = vmatprep.subr.mxu0 0.0
        %526 = vmatpush1.msra.mxu0 0.0
        %527 = vmatprep.subr.mxu0 0.0
        %528 = vmatpush1.msra.mxu0 0.0
        %529 = vmatprep.subr.mxu0 0.0
        %530 = vmatpush1.msra.mxu0 0.0
        %531 = vmatprep.subr.mxu0 0.0
        %532 = vmatpush1.msra.mxu0 0.0
        %533 = vmatprep.subr.mxu0 0.0
        %534 = vmatpush1.msra.mxu0 0.0
        %535 = vmatprep.subr.mxu0 0.0
        %536 = vmatpush1.msra.mxu0 0.0
        %537 = vmatprep.subr.mxu0 0.0
        %538 = vmatpush1.msra.mxu0 0.0
        %539 = vmatprep.subr.mxu0 0.0
        %540 = vmatpush1.msra.mxu0 0.0
        %541 = vmatprep.subr.mxu0 0.0
        %542 = vmatpush1.msra.mxu0 0.0
        %543 = vmatprep.subr.mxu0 0.0
        %544 = vmatpush1.msra.mxu0 0.0
        %545 = vmatprep.subr.mxu0 0.0
        %546 = vmatpush1.msra.mxu0 0.0
        %547 = vmatprep.subr.mxu0 0.0
        %548 = vmatpush1.msra.mxu0 0.0
        %549 = vmatprep.subr.mxu0 0.0
        %550 = vmatpush1.msra.mxu0 0.0
        %551 = vmatprep.mubr.f32.mxu0 0.0
        %552 = vmatmul.mubr.f32.gmra.mrb[0].mxu0 %v476
        %v553 = vpop.f32.mrb[0].mxu0
        %v554 = vadd.f32 %v472, %v553
        %v555 = vpop.f32.mrb[0].mxu0
        %556 = vmatprep.mubr.f32.mxu0 0.0
        %557 = vmatmul.mubr.f32.gmra.mrb[0].mxu0 %v479
        %v558 = vpop.f32.mrb[0].mxu0
        %v559 = vadd.f32 %v472, %v558
        %v560 = vpop.f32.mrb[0].mxu0
        %561 = vmatprep.mubr.f32.mxu0 0.0
        %562 = vmatmul.mubr.f32.gmra.mrb[0].mxu0 %v482
        %v563 = vpop.f32.mrb[0].mxu0
        %v564 = vadd.f32 %v472, %v563
        %v565 = vpop.f32.mrb[0].mxu0
        %566 = vmatprep.mubr.f32.mxu0 0.0
        %567 = vmatmul.mubr.f32.gmra.mrb[0].mxu0 %v485
        %v568 = vpop.f32.mrb[0].mxu0
        %v569 = vadd.f32 %v472, %v568
        %v570 = vpop.f32.mrb[0].mxu0
        %571 = vdwg.mxu0
        %vm572 = vcmp.ge.f32.partialorder %v554, 0.0
        %vm573 = vcmp.ge.f32.partialorder %v559, 0.0
        %vm574 = vcmp.ge.f32.partialorder %v564, 0.0
        %vm575 = vcmp.ge.f32.partialorder %v569, 0.0
        %v576 = vmul.f32 %v554, 0.01
        %v577 = vmul.f32 %v559, 0.01
        %v578 = vmul.f32 %v564, 0.01
        %v579 = vmul.f32 %v569, 0.01
        %v580 = vsel %vm572, %v554, %v576
        %v581 = vsel %vm573, %v559, %v577
        %v582 = vsel %vm574, %v564, %v578
        %v583 = vsel %vm575, %v569, %v579
        %v584 = vld [vmem:[%s5] sm:$0xff]
        %v585 = vld [vmem:[%s5 + $0x8] sm:$0xff]
        %v586 = vld [vmem:[%s5 + $0x10] sm:$0xff]
        %v587 = vld [vmem:[%s5 + $0x18] sm:$0xff]
        %v588 = vld [vmem:[%s6] sm:$0x1]
        %v590 = vlaneseq
        %v591 = vshrl.u32 %v590, 7
        %v592 = vsub.s32 0, %v591
        %v593 = vrot.slane %v588, %v592
        %vm595 = vcmask 261120
        %v597 = vsel %vm595, %v580, 0
        %v600 = vsel %vm595, %v581, 0
        %v603 = vsel %vm595, %v582, 0
        %v606 = vsel %vm595, %v583, 0
        %608 = vmatprep.subr.mxu0 0.0
        %609 = vmatpush1.msra.mxu0 %v584
        %610 = vmatprep.subr.mxu0 0.0
        %611 = vmatpush1.msra.mxu0 %v585
        %612 = vmatprep.subr.mxu0 0.0
        %613 = vmatpush1.msra.mxu0 %v586
        %614 = vmatprep.subr.mxu0 0.0
        %615 = vmatpush1.msra.mxu0 %v587
        %616 = vmatprep.subr.mxu0 0.0
        %617 = vmatpush1.msra.mxu0 0.0
        %618 = vmatprep.subr.mxu0 0.0
        %619 = vmatpush1.msra.mxu0 0.0
        %620 = vmatprep.subr.mxu0 0.0
        %621 = vmatpush1.msra.mxu0 0.0
        %622 = vmatprep.subr.mxu0 0.0
        %623 = vmatpush1.msra.mxu0 0.0
        %624 = vmatprep.subr.mxu0 0.0
        %625 = vmatpush1.msra.mxu0 0.0
        %626 = vmatprep.subr.mxu0 0.0
        %627 = vmatpush1.msra.mxu0 0.0
        %628 = vmatprep.subr.mxu0 0.0
        %629 = vmatpush1.msra.mxu0 0.0
        %630 = vmatprep.subr.mxu0 0.0
        %631 = vmatpush1.msra.mxu0 0.0
        %632 = vmatprep.subr.mxu0 0.0
        %633 = vmatpush1.msra.mxu0 0.0
        %634 = vmatprep.subr.mxu0 0.0
        %635 = vmatpush1.msra.mxu0 0.0
        %636 = vmatprep.subr.mxu0 0.0
        %637 = vmatpush1.msra.mxu0 0.0
        %638 = vmatprep.subr.mxu0 0.0
        %639 = vmatpush1.msra.mxu0 0.0
        %640 = vmatprep.subr.mxu0 0.0
        %641 = vmatpush1.msra.mxu0 0.0
        %642 = vmatprep.subr.mxu0 0.0
        %643 = vmatpush1.msra.mxu0 0.0
        %644 = vmatprep.subr.mxu0 0.0
        %645 = vmatpush1.msra.mxu0 0.0
        %646 = vmatprep.subr.mxu0 0.0
        %647 = vmatpush1.msra.mxu0 0.0
        %648 = vmatprep.subr.mxu0 0.0
        %649 = vmatpush1.msra.mxu0 0.0
        %650 = vmatprep.subr.mxu0 0.0
        %651 = vmatpush1.msra.mxu0 0.0
        %652 = vmatprep.subr.mxu0 0.0
        %653 = vmatpush1.msra.mxu0 0.0
        %654 = vmatprep.subr.mxu0 0.0
        %655 = vmatpush1.msra.mxu0 0.0
        %656 = vmatprep.subr.mxu0 0.0
        %657 = vmatpush1.msra.mxu0 0.0
        %658 = vmatprep.subr.mxu0 0.0
        %659 = vmatpush1.msra.mxu0 0.0
        %660 = vmatprep.subr.mxu0 0.0
        %661 = vmatpush1.msra.mxu0 0.0
        %662 = vmatprep.subr.mxu0 0.0
        %663 = vmatpush1.msra.mxu0 0.0
        %664 = vmatprep.subr.mxu0 0.0
        %665 = vmatpush1.msra.mxu0 0.0
        %666 = vmatprep.subr.mxu0 0.0
        %667 = vmatpush1.msra.mxu0 0.0
        %668 = vmatprep.subr.mxu0 0.0
        %669 = vmatpush1.msra.mxu0 0.0
        %670 = vmatprep.subr.mxu0 0.0
        %671 = vmatpush1.msra.mxu0 0.0
        %672 = vmatprep.mubr.f32.mxu0 0.0
        %673 = vmatmul.mubr.f32.gmra.mrb[0].mxu0 %v597
        %v674 = vpop.f32.mrb[0].mxu0
        %v675 = vadd.f32 %v593, %v674
        %v676 = vpop.f32.mrb[0].mxu0
        %677 = vmatprep.mubr.f32.mxu0 0.0
        %678 = vmatmul.mubr.f32.gmra.mrb[0].mxu0 %v600
        %v679 = vpop.f32.mrb[0].mxu0
        %v680 = vadd.f32 %v593, %v679
        %v681 = vpop.f32.mrb[0].mxu0
        %682 = vmatprep.mubr.f32.mxu0 0.0
        %683 = vmatmul.mubr.f32.gmra.mrb[0].mxu0 %v603
        %v684 = vpop.f32.mrb[0].mxu0
        %v685 = vadd.f32 %v593, %v684
        %v686 = vpop.f32.mrb[0].mxu0
        %687 = vmatprep.mubr.f32.mxu0 0.0
        %688 = vmatmul.mubr.f32.gmra.mrb[0].mxu0 %v606
        %v689 = vpop.f32.mrb[0].mxu0
        %v690 = vadd.f32 %v593, %v689
        %v691 = vpop.f32.mrb[0].mxu0
        %692 = vdwg.mxu0
        %vm693 = vcmp.ge.f32.partialorder %v675, 0.0
        %vm694 = vcmp.ge.f32.partialorder %v680, 0.0
        %vm695 = vcmp.ge.f32.partialorder %v685, 0.0
        %vm696 = vcmp.ge.f32.partialorder %v690, 0.0
        %v697 = vmul.f32 %v675, 0.01
        %v698 = vmul.f32 %v680, 0.01
        %v699 = vmul.f32 %v685, 0.01
        %v700 = vmul.f32 %v690, 0.01
        %v701 = vsel %vm693, %v675, %v697
        %v702 = vsel %vm694, %v680, %v698
        %v703 = vsel %vm695, %v685, %v699
        %v704 = vsel %vm696, %v690, %v700
        %v705 = vld [vmem:[%s7] sm:$0xff]
        %v706 = vld [vmem:[%s7 + $0x8] sm:$0xff]
        %v707 = vld [vmem:[%s7 + $0x10] sm:$0xff]
        %v708 = vld [vmem:[%s7 + $0x18] sm:$0xff]
        %v709 = vld [vmem:[%s7 + $0x20] sm:$0xff]
        %v710 = vld [vmem:[%s7 + $0x28] sm:$0xff]
        %v711 = vld [vmem:[%s7 + $0x30] sm:$0xff]
        %v712 = vld [vmem:[%s7 + $0x38] sm:$0xff]
        %v713 = vld [vmem:[%s7 + $0x40] sm:$0xff]
        %v714 = vld [vmem:[%s8] sm:$0x1]
        %v716 = vlaneseq
        %v717 = vshrl.u32 %v716, 7
        %v718 = vsub.s32 0, %v717
        %v719 = vrot.slane %v714, %v718
        %v722 = vsel %vm474, %v701, 0
        %v725 = vsel %vm474, %v702, 0
        %v728 = vsel %vm474, %v703, 0
        %v731 = vsel %vm474, %v704, 0
        %733 = vmatprep.subr.mxu0 0.0
        %734 = vmatpush1.msra.mxu0 %v705
        %735 = vmatprep.subr.mxu0 0.0
        %736 = vmatpush1.msra.mxu0 %v706
        %737 = vmatprep.subr.mxu0 0.0
        %738 = vmatpush1.msra.mxu0 %v707
        %739 = vmatprep.subr.mxu0 0.0
        %740 = vmatpush1.msra.mxu0 %v708
        %741 = vmatprep.subr.mxu0 0.0
        %742 = vmatpush1.msra.mxu0 %v709
        %743 = vmatprep.subr.mxu0 0.0
        %744 = vmatpush1.msra.mxu0 %v710
        %745 = vmatprep.subr.mxu0 0.0
        %746 = vmatpush1.msra.mxu0 %v711
        %747 = vmatprep.subr.mxu0 0.0
        %748 = vmatpush1.msra.mxu0 %v712
        %749 = vmatprep.subr.mxu0 0.0
        %750 = vmatpush1.msra.mxu0 %v713
        %751 = vmatprep.subr.mxu0 0.0
        %752 = vmatpush1.msra.mxu0 0.0
        %753 = vmatprep.subr.mxu0 0.0
        %754 = vmatpush1.msra.mxu0 0.0
        %755 = vmatprep.subr.mxu0 0.0
        %756 = vmatpush1.msra.mxu0 0.0
        %757 = vmatprep.subr.mxu0 0.0
        %758 = vmatpush1.msra.mxu0 0.0
        %759 = vmatprep.subr.mxu0 0.0
        %760 = vmatpush1.msra.mxu0 0.0
        %761 = vmatprep.subr.mxu0 0.0
        %762 = vmatpush1.msra.mxu0 0.0
        %763 = vmatprep.subr.mxu0 0.0
        %764 = vmatpush1.msra.mxu0 0.0
        %765 = vmatprep.subr.mxu0 0.0
        %766 = vmatpush1.msra.mxu0 0.0
        %767 = vmatprep.subr.mxu0 0.0
        %768 = vmatpush1.msra.mxu0 0.0
        %769 = vmatprep.subr.mxu0 0.0
        %770 = vmatpush1.msra.mxu0 0.0
        %771 = vmatprep.subr.mxu0 0.0
        %772 = vmatpush1.msra.mxu0 0.0
        %773 = vmatprep.subr.mxu0 0.0
        %774 = vmatpush1.msra.mxu0 0.0
        %775 = vmatprep.subr.mxu0 0.0
        %776 = vmatpush1.msra.mxu0 0.0
        %777 = vmatprep.subr.mxu0 0.0
        %778 = vmatpush1.msra.mxu0 0.0
        %779 = vmatprep.subr.mxu0 0.0
        %780 = vmatpush1.msra.mxu0 0.0
        %781 = vmatprep.subr.mxu0 0.0
        %782 = vmatpush1.msra.mxu0 0.0
        %783 = vmatprep.subr.mxu0 0.0
        %784 = vmatpush1.msra.mxu0 0.0
        %785 = vmatprep.subr.mxu0 0.0
        %786 = vmatpush1.msra.mxu0 0.0
        %787 = vmatprep.subr.mxu0 0.0
        %788 = vmatpush1.msra.mxu0 0.0
        %789 = vmatprep.subr.mxu0 0.0
        %790 = vmatpush1.msra.mxu0 0.0
        %791 = vmatprep.subr.mxu0 0.0
        %792 = vmatpush1.msra.mxu0 0.0
        %793 = vmatprep.subr.mxu0 0.0
        %794 = vmatpush1.msra.mxu0 0.0
        %795 = vmatprep.subr.mxu0 0.0
        %796 = vmatpush1.msra.mxu0 0.0
        %797 = vmatprep.mubr.f32.mxu0 0.0
        %798 = vmatmul.mubr.f32.gmra.mrb[0].mxu0 %v722
        %v799 = vpop.f32.mrb[0].mxu0
        %v800 = vadd.f32 %v719, %v799
        %v801 = vpop.f32.mrb[0].mxu0
        %802 = vmatprep.mubr.f32.mxu0 0.0
        %803 = vmatmul.mubr.f32.gmra.mrb[0].mxu0 %v725
        %v804 = vpop.f32.mrb[0].mxu0
        %v805 = vadd.f32 %v719, %v804
        %v806 = vpop.f32.mrb[0].mxu0
        %807 = vmatprep.mubr.f32.mxu0 0.0
        %808 = vmatmul.mubr.f32.gmra.mrb[0].mxu0 %v728
        %v809 = vpop.f32.mrb[0].mxu0
        %v810 = vadd.f32 %v719, %v809
        %v811 = vpop.f32.mrb[0].mxu0
        %812 = vmatprep.mubr.f32.mxu0 0.0
        %813 = vmatmul.mubr.f32.gmra.mrb[0].mxu0 %v731
        %v814 = vpop.f32.mrb[0].mxu0
        %v815 = vadd.f32 %v719, %v814
        %v816 = vpop.f32.mrb[0].mxu0
        %817 = vdwg.mxu0
        %vm818 = vcmp.ge.f32.partialorder %v800, 0.0
        %vm819 = vcmp.ge.f32.partialorder %v805, 0.0
        %vm820 = vcmp.ge.f32.partialorder %v810, 0.0
        %vm821 = vcmp.ge.f32.partialorder %v815, 0.0
        %v822 = vmul.f32 %v800, 0.01
        %v823 = vmul.f32 %v805, 0.01
        %v824 = vmul.f32 %v810, 0.01
        %v825 = vmul.f32 %v815, 0.01
        %v826 = vsel %vm818, %v800, %v822
        %v827 = vsel %vm819, %v805, %v823
        %v828 = vsel %vm820, %v810, %v824
        %v829 = vsel %vm821, %v815, %v825
        %830 = vst [vmem:[%s326] sm:$0xff] %v826
        %831 = vst [vmem:[%s326 + $0x8] sm:$0xff] %v827
        %832 = vst [vmem:[%s326 + $0x10] sm:$0xff] %v828
        %833 = vst [vmem:[%s326 + $0x18] sm:$0xff] %v829
        %s834 = sand.u32 %s225, 1
        %s835 = scalar_lea.sflag [#allocation3], %s834
        %s836 = sand.u32 %s225, 1
        %s837 = smul.addr %s836, 32
        %s838 = scalar_lea.vmem [#allocation2], %s837
        // Predicated region
        $region57: #{tpu_custom_call.1} parent=55 // pred_check
          %p839 = pneg %p235
        $region58: #{tpu_custom_call.1} parent=55 // pred_check_branch
          %841 = sbr.rel (%p839) target = $region60
        $region59: #{tpu_custom_call.1} parent=55 // pred_region
          %s842 = smul.u32 4, %s23
          %s844 = ssub.s32 512, 512
          %845 = vsyncadd %s835, %s844
          %s846 = smul.addr %s842, 128
          %s847 = scalar_lea.hbm %s9, %s846
          %s848 = sshll.u32 %s838, 4
          %s849 = int_to_ptr.vmem [resolvable:$true] %s848
          %854 = dma.vmem_to_hbm [thread:$0]  %s849, 512, %s847, %s835, 128, 128, 8
        $region60: #{tpu_custom_call.1} parent=55 // pred_fallthru
          _
      $region56: #{tpu_custom_call.1} parent=5 // pred_fallthru
        _
      %p855 = scmp.le.s32.totalorder 2, %s18
      // Predicated region
      $region61: #{tpu_custom_call.1} parent=5 // pred_check
        %p856 = pneg %p855
      $region62: #{tpu_custom_call.1} parent=5 // pred_check_branch
        %858 = sbr.rel (%p856) target = $region64
      $region63: #{tpu_custom_call.1} parent=5 // pred_region
        %s859 = ssub.s32 %s18, 2
        // Predicated region
        $region65: #{tpu_custom_call.1} parent=63 // pred_check
          %p860 = pneg %p241
        $region66: #{tpu_custom_call.1} parent=63 // pred_check_branch
          %862 = sbr.rel (%p860) target = $region68
        $region67: #{tpu_custom_call.1} parent=63 // pred_region
          %s863 = sand.u32 %s226, 1
          %s864 = scalar_lea.sflag [#allocation3], %s863
          %s865 = sand.u32 %s226, 1
          %s866 = smul.addr %s865, 32
          %s867 = scalar_lea.vmem [#allocation2], %s866
          %868 = dma.done %s864, 512
        $region68: #{tpu_custom_call.1} parent=63 // pred_fallthru
          _
      $region64: #{tpu_custom_call.1} parent=5 // pred_fallthru
        _
    $region6: #{tpu_custom_call.1} parent=1 // loop_footer
      %s22 = sadd.s32 1, %s18
    $region7: #{tpu_custom_call.1} parent=1 // loop_footer_branch
      %17 = sbr.rel target = $region3
    $region8: #{tpu_custom_call.1} parent=1 // loop_exit
      _
    %869 = vsyncpa [#allocation3], 1
    %s870 = scalar_lea.sflag [#allocation3], 1
    %871 = vsyncpa %s870, 1

</llo_original>
